<compile_context>
chip_gen: v7x
topology: tpu7x:2x2x1
jax: 0.10.0
libtpu: 0.0.40
codegen_flags: <defaults>
</compile_context>

<pallas_src>
import jax
import jax.numpy as jnp
from jax.experimental import pallas as pl
from jax.experimental.pallas import tpu as pltpu

_MIB = 1 << 20


def _round_up(n, m):
    return ((n + m - 1) // m) * m


def _ff_kernel(x_ref, w1_ref, b1_ref, w2_ref, b2_ref, w3_ref, b3_ref, o_ref):
    """fc1 -> ReLU -> fc2 -> ReLU -> fc3(H->1) -> sigmoid for one (tm, in_dim) batch tile."""
    x = x_ref[...]
    if x.dtype != jnp.bfloat16:          # trace-time static; no-op if the producer sends bf16
        x = x.astype(jnp.bfloat16)
    # fc1 + ReLU: bf16 MXU operands, f32 accumulate; bias add / ReLU stay f32 on the VPU.
    h1 = jnp.dot(x, w1_ref[...], preferred_element_type=jnp.float32) + b1_ref[...]
    h1 = jnp.maximum(h1, 0.0)
    # fc2 + ReLU.
    h2 = jnp.dot(h1.astype(jnp.bfloat16), w2_ref[...],
                 preferred_element_type=jnp.float32) + b2_ref[...]
    h2 = jnp.maximum(h2, 0.0)
    # fc3 (out_features = 1) + sigmoid: VPU multiply + XLU lane reduce, scalar bias from SMEM.
    logit = jnp.sum(h2 * w3_ref[...], axis=-1, keepdims=True) + b3_ref[0, 0]
    o_ref[...] = jax.nn.sigmoid(logit).astype(o_ref.dtype)


def _vmem_bytes(tm, in_dim, H, x_itemsize):
    """Rough VMEM budget: resident bf16 weights + f32 biases, double-buffered x/out tiles,
    and the live f32 h1/h2 intermediates."""
    weights = in_dim * H * 2 + H * H * 2 + 3 * H * 4 + 128
    stream = 2 * tm * in_dim * x_itemsize + 2 * tm * 4
    interm = 2 * tm * H * 4
    return weights + stream + interm


def _build_call(B, in_dim, H, tm, vmem_limit_bytes, cost, single_buffer_weights):
    if single_buffer_weights:
        # Constant-index blocks never change; double-buffering them only wastes VMEM.
        def const_spec(shape):
            return pl.BlockSpec(shape, lambda i: (0, 0), pipeline_mode=pl.Buffered(1))
    else:
        def const_spec(shape):
            return pl.BlockSpec(shape, lambda i: (0, 0))

    return pl.pallas_call(
        _ff_kernel,
        out_shape=jax.ShapeDtypeStruct((B, 1), jnp.float32),
        grid=(pl.cdiv(B, tm),),
        in_specs=[
            pl.BlockSpec((tm, in_dim), lambda i: (i, 0)),       # x: streamed per batch tile
            const_spec((in_dim, H)),                            # w1 (bf16): VMEM-resident
            const_spec((1, H)),                                 # b1 (f32): resident
            const_spec((H, H)),                                 # w2 (bf16): resident
            const_spec((1, H)),                                 # b2 (f32): resident
            const_spec((1, H)),                                 # w3 row (f32): resident
            pl.BlockSpec(memory_space=pltpu.MemorySpace.SMEM),  # b3 scalar in SMEM
        ],
        out_specs=pl.BlockSpec((tm, 1), lambda i: (i, 0)),
        compiler_params=pltpu.CompilerParams(
            dimension_semantics=("parallel",),
            vmem_limit_bytes=vmem_limit_bytes,
        ),
        cost_estimate=cost,
    )


def feedforward(x, params, *, block_rows=1024):
    """x: [B, input_size] float32 (or bf16 from an upstream producer).
    params: dict with w1/w2 stored transposed as [in, out] (ideally bf16), w3 as a (1, H) row."""
    w1, b1 = params["w1"], params["b1"]
    w2, b2 = params["w2"], params["b2"]
    w3, b3 = params["w3"], params["b3"]

    # MXU-path weights go in as bf16 (pre-cast at the producer in init_params); cast
    # defensively so f32 params still work.  Biases / w3 / b3 stay f32.
    if w1.dtype != jnp.bfloat16:
        w1 = w1.astype(jnp.bfloat16)
    if w2.dtype != jnp.bfloat16:
        w2 = w2.astype(jnp.bfloat16)

    B, in_dim = x.shape
    H = w1.shape[1]

    # Batch tile: multiple of 8 sublanes.  Default 1024 rows amortizes per-grid-step
    # overhead; shrink until the rough VMEM budget fits a conservative 40 MiB cap
    # (leaves headroom on v7x's 64 MiB per-TC VMEM).
    tm = _round_up(min(block_rows, B), 8)
    while _vmem_bytes(tm, in_dim, H, x.dtype.itemsize) > 40 * _MIB and tm > 8:
        tm = max(8, _round_up(tm // 2, 8))

    budget = _vmem_bytes(tm, in_dim, H, x.dtype.itemsize)
    vmem_limit = int(min(64 * _MIB, max(32 * _MIB, budget + 16 * _MIB)))

    flops = 2 * B * (in_dim * H + H * H + H)
    bytes_accessed = (B * in_dim * x.dtype.itemsize      # x stream
                      + in_dim * H * 2 + H * H * 2       # bf16 w1, w2
                      + 3 * H * 4 + 4                    # b1, b2, w3, b3 (f32)
                      + B * 4)                           # output
    cost = pl.CostEstimate(flops=flops, transcendentals=B, bytes_accessed=bytes_accessed)

    args = (x, w1, b1, w2, b2, w3, b3)
    try:
        return _build_call(B, in_dim, H, tm, vmem_limit, cost, True)(*args)
    except Exception:
        # Installed jax may reject Buffered(1); fall back to default double-buffering
        # (correctness identical, only a little extra VMEM for the constant blocks).
        return _build_call(B, in_dim, H, tm, vmem_limit, cost, False)(*args)


def init_params(key, input_size, hidden_size):
    """torch.nn.Linear-style init (uniform +/- 1/sqrt(fan_in)).
    w1/w2 are stored transposed as [in, out] and pre-cast to bf16 (the MXU operand dtype),
    w3 is stored as a (1, H) f32 row; biases stay f32."""
    k1, k2, k3, k4, k5, k6 = jax.random.split(key, 6)

    def unif(k, shape, fan_in, dtype=jnp.float32):
        bound = 1.0 / jnp.sqrt(jnp.float32(fan_in))
        return jax.random.uniform(k, shape, jnp.float32, -bound, bound).astype(dtype)

    return {
        "w1": unif(k1, (input_size, hidden_size), input_size, jnp.bfloat16),
        "b1": unif(k2, (1, hidden_size), input_size),
        "w2": unif(k3, (hidden_size, hidden_size), hidden_size, jnp.bfloat16),
        "b2": unif(k4, (1, hidden_size), hidden_size),
        "w3": unif(k5, (1, hidden_size), hidden_size),
        "b3": unif(k6, (1, 1), hidden_size),
    }


def feedforward_ref(x, p):
    w1 = p["w1"].astype(jnp.float32)
    w2 = p["w2"].astype(jnp.float32)
    h1 = jnp.maximum(x @ w1 + p["b1"], 0.0)
    h2 = jnp.maximum(h1 @ w2 + p["b2"], 0.0)
    return jax.nn.sigmoid(h2 @ p["w3"].T + p["b3"])


if __name__ == "__main__":
    # Small demo shapes; batch=20 with block_rows=8 exercises a multi-step grid with a
    # ragged last tile (20 % 8 != 0) and no wrapper-side pad copy.
    batch, input_size, hidden_size = 20, 32, 128
    key = jax.random.PRNGKey(0)
    kx, kp = jax.random.split(key)
    x = jax.random.normal(kx, (batch, input_size), jnp.float32)
    params = init_params(kp, input_size, hidden_size)

    ref = feedforward_ref(x, params)

    # Multi-step grid + ragged tail.
    out_small = jax.block_until_ready(feedforward(x, params, block_rows=8))
    # Default (single-tile) path.
    out_default = jax.block_until_ready(feedforward(x, params))

    assert out_small.shape == (batch, 1)
    assert out_default.shape == (batch, 1)
    # bf16 MXU operands (f32 accumulate) introduce small drift vs the f32 reference.
    assert jnp.allclose(out_small, ref, atol=2e-2, rtol=2e-2)
    assert jnp.allclose(out_default, ref, atol=2e-2, rtol=2e-2)
    print("KERNEL_OK")
</pallas_src>

<mosaic_0001>
module attributes {stable_mosaic.version = 11 : i64} {
  func.func @_ff_kernel(%arg0: i32, %arg1: memref<8x32xf32, #tpu.memory_space<vmem>>, %arg2: memref<32x128xbf16, #tpu.memory_space<vmem>>, %arg3: memref<1x128xf32, #tpu.memory_space<vmem>>, %arg4: memref<128x128xbf16, #tpu.memory_space<vmem>>, %arg5: memref<1x128xf32, #tpu.memory_space<vmem>>, %arg6: memref<1x128xf32, #tpu.memory_space<vmem>>, %arg7: memref<1x1xf32, #tpu.memory_space<smem>>, %arg8: memref<8x1xf32, #tpu.memory_space<vmem>>) attributes {dimension_semantics = [#tpu.dimension_semantics<parallel>], iteration_bounds = array<i64: 3>, scalar_prefetch = 0 : i64, scratch_operands = 0 : i64, tpu.core_type = #tpu.core_type<tc>, window_params = [{transform_indices = @transform_0, window_bounds = array<i64: 8, 32>}, {pipeline_mode = #tpu.pipeline_mode<synchronous>, transform_indices = @transform_1, window_bounds = array<i64: 32, 128>}, {pipeline_mode = #tpu.pipeline_mode<synchronous>, transform_indices = @transform_2, window_bounds = array<i64: 1, 128>}, {pipeline_mode = #tpu.pipeline_mode<synchronous>, transform_indices = @transform_3, window_bounds = array<i64: 128, 128>}, {pipeline_mode = #tpu.pipeline_mode<synchronous>, transform_indices = @transform_4, window_bounds = array<i64: 1, 128>}, {pipeline_mode = #tpu.pipeline_mode<synchronous>, transform_indices = @transform_5, window_bounds = array<i64: 1, 128>}, {transform_indices = @transform_6, window_bounds = array<i64: 1, 1>}, {transform_indices = @transform_7, window_bounds = array<i64: 8, 1>}]} {
    %c0 = arith.constant 0 : index
    %c0_0 = arith.constant 0 : index
    %0 = vector.load %arg1[%c0, %c0_0] : memref<8x32xf32, #tpu.memory_space<vmem>>, vector<8x32xf32>
    %1 = arith.truncf %0 : vector<8x32xf32> to vector<8x32xbf16>
    %c0_1 = arith.constant 0 : index
    %c0_2 = arith.constant 0 : index
    %2 = vector.load %arg2[%c0_1, %c0_2] : memref<32x128xbf16, #tpu.memory_space<vmem>>, vector<32x128xbf16>
    %cst = arith.constant dense<0.000000e+00> : vector<8x128xf32>
    %3 = tpu.matmul %1, %2, %cst {dimension_numbers = #tpu.dot_dimension_numbers<[1], [0], [0], [1], [0, 0, 1, 1], [], []>} : vector<8x32xbf16>, vector<32x128xbf16>, vector<8x128xf32> -> vector<8x128xf32>
    %c0_3 = arith.constant 0 : index
    %c0_4 = arith.constant 0 : index
    %4 = vector.load %arg3[%c0_3, %c0_4] : memref<1x128xf32, #tpu.memory_space<vmem>>, vector<1x128xf32>
    %5 = vector.broadcast %4 : vector<1x128xf32> to vector<8x128xf32>
    %6 = arith.addf %3, %5 : vector<8x128xf32>
    %cst_5 = arith.constant 0.000000e+00 : f32
    %7 = vector.broadcast %cst_5 : f32 to vector<8x128xf32>
    %8 = arith.maximumf %6, %7 : vector<8x128xf32>
    %9 = arith.truncf %8 : vector<8x128xf32> to vector<8x128xbf16>
    %c0_6 = arith.constant 0 : index
    %c0_7 = arith.constant 0 : index
    %10 = vector.load %arg4[%c0_6, %c0_7] : memref<128x128xbf16, #tpu.memory_space<vmem>>, vector<128x128xbf16>
    %cst_8 = arith.constant dense<0.000000e+00> : vector<8x128xf32>
    %11 = tpu.matmul %9, %10, %cst_8 {dimension_numbers = #tpu.dot_dimension_numbers<[1], [0], [0], [1], [0, 0, 1, 1], [], []>} : vector<8x128xbf16>, vector<128x128xbf16>, vector<8x128xf32> -> vector<8x128xf32>
    %c0_9 = arith.constant 0 : index
    %c0_10 = arith.constant 0 : index
    %12 = vector.load %arg5[%c0_9, %c0_10] : memref<1x128xf32, #tpu.memory_space<vmem>>, vector<1x128xf32>
    %13 = vector.broadcast %12 : vector<1x128xf32> to vector<8x128xf32>
    %14 = arith.addf %11, %13 : vector<8x128xf32>
    %cst_11 = arith.constant 0.000000e+00 : f32
    %15 = vector.broadcast %cst_11 : f32 to vector<8x128xf32>
    %16 = arith.maximumf %14, %15 : vector<8x128xf32>
    %c0_12 = arith.constant 0 : index
    %c0_13 = arith.constant 0 : index
    %17 = vector.load %arg6[%c0_12, %c0_13] : memref<1x128xf32, #tpu.memory_space<vmem>>, vector<1x128xf32>
    %18 = vector.broadcast %17 : vector<1x128xf32> to vector<8x128xf32>
    %19 = arith.mulf %16, %18 : vector<8x128xf32>
    %cst_14 = arith.constant dense<0.000000e+00> : vector<8xf32>
    %20 = vector.multi_reduction <add>, %19, %cst_14 [1] : vector<8x128xf32> to vector<8xf32>
    %21 = vector.shape_cast %20 : vector<8xf32> to vector<8x1xf32>
    %c0_15 = arith.constant 0 : index
    %c0_16 = arith.constant 0 : index
    %22 = memref.load %arg7[%c0_15, %c0_16] : memref<1x1xf32, #tpu.memory_space<smem>>
    %23 = vector.broadcast %22 : f32 to vector<8x1xf32>
    %24 = arith.addf %21, %23 : vector<8x1xf32>
    %25 = arith.negf %24 : vector<8x1xf32>
    %26 = math.exp %25 : vector<8x1xf32>
    %cst_17 = arith.constant 1.000000e+00 : f32
    %27 = vector.broadcast %cst_17 : f32 to vector<8x1xf32>
    %28 = arith.addf %27, %26 : vector<8x1xf32>
    %29 = arith.divf %27, %28 : vector<8x1xf32>
    %c0_18 = arith.constant 0 : index
    %c0_19 = arith.constant 0 : index
    %30 = vector.load %arg8[%c0_18, %c0_19] : memref<8x1xf32, #tpu.memory_space<vmem>>, vector<8x1xf32>
    tpu.vector_store %arg8[%c0_18, %c0_19], %29 {strides = array<i32>} : memref<8x1xf32, #tpu.memory_space<vmem>>, vector<8x1xf32>,
    return
  }
  func.func @transform_0(%arg0: i32) -> (i32, i32) {
    %c0_i32 = arith.constant 0 : i32
    %c0_i32_0 = arith.constant 0 : i32
    return %arg0, %c0_i32 : i32, i32
  }
  func.func @transform_1(%arg0: i32) -> (i32, i32) {
    %c0_i32 = arith.constant 0 : i32
    %c0_i32_0 = arith.constant 0 : i32
    %c0_i32_1 = arith.constant 0 : i32
    return %c0_i32, %c0_i32_0 : i32, i32
  }
  func.func @transform_2(%arg0: i32) -> (i32, i32) {
    %c0_i32 = arith.constant 0 : i32
    %c0_i32_0 = arith.constant 0 : i32
    %c0_i32_1 = arith.constant 0 : i32
    return %c0_i32, %c0_i32_0 : i32, i32
  }
  func.func @transform_3(%arg0: i32) -> (i32, i32) {
    %c0_i32 = arith.constant 0 : i32
    %c0_i32_0 = arith.constant 0 : i32
    %c0_i32_1 = arith.constant 0 : i32
    return %c0_i32, %c0_i32_0 : i32, i32
  }
  func.func @transform_4(%arg0: i32) -> (i32, i32) {
    %c0_i32 = arith.constant 0 : i32
    %c0_i32_0 = arith.constant 0 : i32
    %c0_i32_1 = arith.constant 0 : i32
    return %c0_i32, %c0_i32_0 : i32, i32
  }
  func.func @transform_5(%arg0: i32) -> (i32, i32) {
    %c0_i32 = arith.constant 0 : i32
    %c0_i32_0 = arith.constant 0 : i32
    %c0_i32_1 = arith.constant 0 : i32
    return %c0_i32, %c0_i32_0 : i32, i32
  }
  func.func @transform_6(%arg0: i32) -> (i32, i32) {
    %c0_i32 = arith.constant 0 : i32
    %c0_i32_0 = arith.constant 0 : i32
    %c0_i32_1 = arith.constant 0 : i32
    return %c0_i32, %c0_i32_0 : i32, i32
  }
  func.func @transform_7(%arg0: i32) -> (i32, i32) {
    %c0_i32 = arith.constant 0 : i32
    %c0_i32_0 = arith.constant 0 : i32
    return %arg0, %c0_i32 : i32, i32
  }
}

module attributes {stable_mosaic.version = 11 : i64} {
  func.func @_ff_kernel(%arg0: i32, %arg1: memref<8x32xf32, #tpu.memory_space<vmem>>, %arg2: memref<32x128xbf16, #tpu.memory_space<vmem>>, %arg3: memref<1x128xf32, #tpu.memory_space<vmem>>, %arg4: memref<128x128xbf16, #tpu.memory_space<vmem>>, %arg5: memref<1x128xf32, #tpu.memory_space<vmem>>, %arg6: memref<1x128xf32, #tpu.memory_space<vmem>>, %arg7: memref<1x1xf32, #tpu.memory_space<smem>>, %arg8: memref<8x1xf32, #tpu.memory_space<vmem>>) attributes {dimension_semantics = [#tpu.dimension_semantics<parallel>], iteration_bounds = array<i64: 3>, scalar_prefetch = 0 : i64, scratch_operands = 0 : i64, tpu.core_type = #tpu.core_type<tc>, window_params = [{transform_indices = @transform_0, window_bounds = array<i64: 8, 32>}, {pipeline_mode = #tpu.pipeline_mode<synchronous>, transform_indices = @transform_1, window_bounds = array<i64: 32, 128>}, {pipeline_mode = #tpu.pipeline_mode<synchronous>, transform_indices = @transform_2, window_bounds = array<i64: 1, 128>}, {pipeline_mode = #tpu.pipeline_mode<synchronous>, transform_indices = @transform_3, window_bounds = array<i64: 128, 128>}, {pipeline_mode = #tpu.pipeline_mode<synchronous>, transform_indices = @transform_4, window_bounds = array<i64: 1, 128>}, {pipeline_mode = #tpu.pipeline_mode<synchronous>, transform_indices = @transform_5, window_bounds = array<i64: 1, 128>}, {transform_indices = @transform_6, window_bounds = array<i64: 1, 1>}, {transform_indices = @transform_7, window_bounds = array<i64: 8, 1>}]} {
    %c0 = arith.constant 0 : index
    %c0_0 = arith.constant 0 : index
    %0 = vector.load %arg1[%c0, %c0_0] : memref<8x32xf32, #tpu.memory_space<vmem>>, vector<8x32xf32>
    %1 = arith.truncf %0 : vector<8x32xf32> to vector<8x32xbf16>
    %c0_1 = arith.constant 0 : index
    %c0_2 = arith.constant 0 : index
    %2 = vector.load %arg2[%c0_1, %c0_2] : memref<32x128xbf16, #tpu.memory_space<vmem>>, vector<32x128xbf16>
    %cst = arith.constant dense<0.000000e+00> : vector<8x128xf32>
    %3 = tpu.matmul %1, %2, %cst {dimension_numbers = #tpu.dot_dimension_numbers<[1], [0], [0], [1], [0, 0, 1, 1], [], []>} : vector<8x32xbf16>, vector<32x128xbf16>, vector<8x128xf32> -> vector<8x128xf32>
    %c0_3 = arith.constant 0 : index
    %c0_4 = arith.constant 0 : index
    %4 = vector.load %arg3[%c0_3, %c0_4] : memref<1x128xf32, #tpu.memory_space<vmem>>, vector<1x128xf32>
    %5 = vector.broadcast %4 : vector<1x128xf32> to vector<8x128xf32>
    %6 = arith.addf %3, %5 : vector<8x128xf32>
    %cst_5 = arith.constant 0.000000e+00 : f32
    %7 = vector.broadcast %cst_5 : f32 to vector<8x128xf32>
    %8 = arith.maximumf %6, %7 : vector<8x128xf32>
    %9 = arith.truncf %8 : vector<8x128xf32> to vector<8x128xbf16>
    %c0_6 = arith.constant 0 : index
    %c0_7 = arith.constant 0 : index
    %10 = vector.load %arg4[%c0_6, %c0_7] : memref<128x128xbf16, #tpu.memory_space<vmem>>, vector<128x128xbf16>
    %cst_8 = arith.constant dense<0.000000e+00> : vector<8x128xf32>
    %11 = tpu.matmul %9, %10, %cst_8 {dimension_numbers = #tpu.dot_dimension_numbers<[1], [0], [0], [1], [0, 0, 1, 1], [], []>} : vector<8x128xbf16>, vector<128x128xbf16>, vector<8x128xf32> -> vector<8x128xf32>
    %c0_9 = arith.constant 0 : index
    %c0_10 = arith.constant 0 : index
    %12 = vector.load %arg5[%c0_9, %c0_10] : memref<1x128xf32, #tpu.memory_space<vmem>>, vector<1x128xf32>
    %13 = vector.broadcast %12 : vector<1x128xf32> to vector<8x128xf32>
    %14 = arith.addf %11, %13 : vector<8x128xf32>
    %cst_11 = arith.constant 0.000000e+00 : f32
    %15 = vector.broadcast %cst_11 : f32 to vector<8x128xf32>
    %16 = arith.maximumf %14, %15 : vector<8x128xf32>
    %c0_12 = arith.constant 0 : index
    %c0_13 = arith.constant 0 : index
    %17 = vector.load %arg6[%c0_12, %c0_13] : memref<1x128xf32, #tpu.memory_space<vmem>>, vector<1x128xf32>
    %18 = vector.broadcast %17 : vector<1x128xf32> to vector<8x128xf32>
    %19 = arith.mulf %16, %18 : vector<8x128xf32>
    %cst_14 = arith.constant dense<0.000000e+00> : vector<8xf32>
    %20 = vector.multi_reduction <add>, %19, %cst_14 [1] : vector<8x128xf32> to vector<8xf32>
    %21 = vector.shape_cast %20 : vector<8xf32> to vector<8x1xf32>
    %c0_15 = arith.constant 0 : index
    %c0_16 = arith.constant 0 : index
    %22 = memref.load %arg7[%c0_15, %c0_16] : memref<1x1xf32, #tpu.memory_space<smem>>
    %23 = vector.broadcast %22 : f32 to vector<8x1xf32>
    %24 = arith.addf %21, %23 : vector<8x1xf32>
    %25 = arith.negf %24 : vector<8x1xf32>
    %26 = math.exp %25 : vector<8x1xf32>
    %cst_17 = arith.constant 1.000000e+00 : f32
    %27 = vector.broadcast %cst_17 : f32 to vector<8x1xf32>
    %28 = arith.addf %27, %26 : vector<8x1xf32>
    %29 = arith.divf %27, %28 : vector<8x1xf32>
    %c0_18 = arith.constant 0 : index
    %c0_19 = arith.constant 0 : index
    %30 = vector.load %arg8[%c0_18, %c0_19] : memref<8x1xf32, #tpu.memory_space<vmem>>, vector<8x1xf32>
    tpu.vector_store %arg8[%c0_18, %c0_19], %29 {strides = array<i32>} : memref<8x1xf32, #tpu.memory_space<vmem>>, vector<8x1xf32>,
    return
  }
  func.func @transform_0(%arg0: i32) -> (i32, i32) {
    %c0_i32 = arith.constant 0 : i32
    %c0_i32_0 = arith.constant 0 : i32
    return %arg0, %c0_i32 : i32, i32
  }
  func.func @transform_1(%arg0: i32) -> (i32, i32) {
    %c0_i32 = arith.constant 0 : i32
    %c0_i32_0 = arith.constant 0 : i32
    %c0_i32_1 = arith.constant 0 : i32
    return %c0_i32, %c0_i32_0 : i32, i32
  }
  func.func @transform_2(%arg0: i32) -> (i32, i32) {
    %c0_i32 = arith.constant 0 : i32
    %c0_i32_0 = arith.constant 0 : i32
    %c0_i32_1 = arith.constant 0 : i32
    return %c0_i32, %c0_i32_0 : i32, i32
  }
  func.func @transform_3(%arg0: i32) -> (i32, i32) {
    %c0_i32 = arith.constant 0 : i32
    %c0_i32_0 = arith.constant 0 : i32
    %c0_i32_1 = arith.constant 0 : i32
    return %c0_i32, %c0_i32_0 : i32, i32
  }
  func.func @transform_4(%arg0: i32) -> (i32, i32) {
    %c0_i32 = arith.constant 0 : i32
    %c0_i32_0 = arith.constant 0 : i32
    %c0_i32_1 = arith.constant 0 : i32
    return %c0_i32, %c0_i32_0 : i32, i32
  }
  func.func @transform_5(%arg0: i32) -> (i32, i32) {
    %c0_i32 = arith.constant 0 : i32
    %c0_i32_0 = arith.constant 0 : i32
    %c0_i32_1 = arith.constant 0 : i32
    return %c0_i32, %c0_i32_0 : i32, i32
  }
  func.func @transform_6(%arg0: i32) -> (i32, i32) {
    %c0_i32 = arith.constant 0 : i32
    %c0_i32_0 = arith.constant 0 : i32
    %c0_i32_1 = arith.constant 0 : i32
    return %c0_i32, %c0_i32_0 : i32, i32
  }
  func.func @transform_7(%arg0: i32) -> (i32, i32) {
    %c0_i32 = arith.constant 0 : i32
    %c0_i32_0 = arith.constant 0 : i32
    return %arg0, %c0_i32 : i32, i32
  }
}

</mosaic_0001>

<llo_original>
// kernel: tpu_custom_call.1
$region0: #{tpu_custom_call.1}
  #allocation0 [shape = 'u32[]', space=smem, size = 0x4, offset = 0x4, fixed_abs, tag = 'smem constant byte address 0x4 - core index']
  #allocation1 [shape = 'u32[144,128]{1,0:T(1,128)}', space=vmem, size = 0x12000, scoped, tag = 'internal scratch']
  #allocation2 [shape = 'f32[1,1]{1,0:T(1,128)S(6)}', space=smem, size = 0x200, scoped, tag = 'scoped memory for tpu_custom_call.1']
  %s0 = inlined_call_operand.hbm [shape: f32[20,32], index: 0, kind: input, shape index: {}]
  %s1 = inlined_call_operand.hbm [shape: bf16[32,128], index: 1, kind: input, shape index: {}]
  %s2 = inlined_call_operand.vmem [shape: f32[1,128], index: 2, kind: input, shape index: {}]
  %s3 = inlined_call_operand.hbm [shape: bf16[128,128], index: 3, kind: input, shape index: {}]
  %s4 = inlined_call_operand.vmem [shape: f32[1,128], index: 4, kind: input, shape index: {}]
  %s5 = inlined_call_operand.vmem [shape: f32[1,128], index: 5, kind: input, shape index: {}]
  %s6 = inlined_call_operand.<no memory space> [shape: f32[1,1], index: 6, kind: input, shape index: {}]
  %s7 = inlined_call_operand.vmem [shape: f32[20,1], index: 7, kind: output, shape index: {}]
  %s8 = sld [smem:[#allocation0]]
  $region73: #{tpu_custom_call.1} parent=0
    _
  %s10 = ssub.s32 1, %s8
  %s11 = scalar_select 0, %s10, %s8
  %12 = sst [smem:[#allocation2]] %s6
  $region1: #{tpu_custom_call.1} parent=0
    #allocation3 [shape = 'u8[8192]{0}', space=vmem, size = 0x2000, scoped, tag = 'input window, operand 0']
    #allocation4 [shape = 's32[2]{0}', space=sflag, size = 0x8, scoped, tag = 'scoped memory for tpu_custom_call.1']
    #allocation5 [shape = 'u8[8192]{0}', space=vmem, size = 0x2000, scoped, tag = 'input window, operand 1, single buffered']
    #allocation6 [shape = 's32[1]{0}', space=sflag, size = 0x4, scoped, tag = 'scoped memory for tpu_custom_call.1']
    #allocation7 [shape = 'u8[32768]{0}', space=vmem, size = 0x8000, scoped, tag = 'input window, operand 3, single buffered']
    %13 = vsyncpa [#allocation4], 0
    %s14 = scalar_lea.sflag [#allocation4], 1
    %15 = vsyncpa %s14, 0
    %16 = vsyncpa [#allocation6], 0
    loop: start=0, step=1, limit=5
    $region2: #{tpu_custom_call.1} parent=1 // loop_pre_header
      _
    $region3: #{tpu_custom_call.1} parent=1 // loop_header
      %s18 = sphi 0, %s22
      %p19 = scmp.ge.s32.totalorder %s18, 5
      %s28 = sphi 0, %s30
      %s31 = sphi 0, %s28
      %s32 = sphi 0, %s31
      %s48 = sphi 0, %s32
      %s52 = sphi 0, %s52
      %s54 = sphi 0, %s52
      %s55 = sphi 0, %s54
      %s69 = sphi 0, %s55
      %s73 = sphi 0, %s73
      %s75 = sphi 0, %s73
      %s76 = sphi 0, %s75
      %s90 = sphi 0, %s76
      %s94 = sphi 0, %s94
      %s96 = sphi 0, %s94
      %s97 = sphi 0, %s96
      %s111 = sphi 0, %s97
      %s115 = sphi 0, %s115
      %s117 = sphi 0, %s115
      %s118 = sphi 0, %s117
      %s132 = sphi 0, %s118
      %s136 = sphi 0, %s136
      %s138 = sphi 0, %s136
      %s139 = sphi 0, %s138
      %s153 = sphi 0, %s139
      %s157 = sphi 0, %s157
      %s159 = sphi 0, %s157
      %s160 = sphi 0, %s159
      %s174 = sphi 0, %s160
      %s180 = sphi 0, %s182
      %s183 = sphi 0, %s180
      %s184 = sphi 0, %s183
      %s200 = sphi 0, %s184
    $region4: #{tpu_custom_call.1} parent=1 // loop_header_branch
      %21 = sbr.rel (%p19) target = $region8
    $region5: #{tpu_custom_call.1} parent=1 // loop_body
      %s23 = ssub.s32 %s18, 1
      %s24 = ssub.s32 %s18, 2
      %s25 = sadd.s32 %s18, 1
      %s26 = ssub.s32 %s18, %s25
      %p27 = scmp.eq.s32.totalorder %s26, 0
      %s29 = sadd.s32 %s28, 1
      %s30 = scalar_select %p27, %s28, %s29
      %p33 = pneg %p27
      %p34 = scmp.eq.s32.totalorder %s18, 2
      %p35 = por %p33, %p34
      %p36 = scmp.ne.s32.totalorder %s28, %s31
      %p37 = scmp.eq.s32.totalorder %s18, 0
      %p38 = por %p36, %p37
      %p39 = scmp.ne.s32.totalorder %s28, %s31
      %p40 = scmp.eq.s32.totalorder %s23, 2
      %p41 = por %p39, %p40
      %p42 = scmp.ne.s32.totalorder %s31, %s32
      %p43 = scmp.eq.s32.totalorder %s23, 0
      %p44 = por %p42, %p43
      %p45 = scmp.ne.s32.totalorder %s31, %s32
      %p46 = scmp.eq.s32.totalorder %s24, 2
      %p47 = por %p45, %p46
      %p49 = scmp.ne.s32.totalorder %s32, %s48
      %p50 = scmp.eq.s32.totalorder %s24, 0
      %p51 = por %p49, %p50
      %s53 = sadd.s32 %s52, 1
      %p56 = scmp.eq.s32.totalorder %s18, 2
      %p57 = scmp.ne.s32.totalorder %s52, %s54
      %p58 = scmp.eq.s32.totalorder %s18, 0
      %p59 = por %p57, %p58
      %p60 = scmp.ne.s32.totalorder %s52, %s54
      %p61 = scmp.eq.s32.totalorder %s23, 2
      %p62 = por %p60, %p61
      %p63 = scmp.ne.s32.totalorder %s54, %s55
      %p64 = scmp.eq.s32.totalorder %s23, 0
      %p65 = por %p63, %p64
      %p66 = scmp.ne.s32.totalorder %s54, %s55
      %p67 = scmp.eq.s32.totalorder %s24, 2
      %p68 = por %p66, %p67
      %p70 = scmp.ne.s32.totalorder %s55, %s69
      %p71 = scmp.eq.s32.totalorder %s24, 0
      %p72 = por %p70, %p71
      %s74 = sadd.s32 %s73, 1
      %p77 = scmp.eq.s32.totalorder %s18, 2
      %p78 = scmp.ne.s32.totalorder %s73, %s75
      %p79 = scmp.eq.s32.totalorder %s18, 0
      %p80 = por %p78, %p79
      %p81 = scmp.ne.s32.totalorder %s73, %s75
      %p82 = scmp.eq.s32.totalorder %s23, 2
      %p83 = por %p81, %p82
      %p84 = scmp.ne.s32.totalorder %s75, %s76
      %p85 = scmp.eq.s32.totalorder %s23, 0
      %p86 = por %p84, %p85
      %p87 = scmp.ne.s32.totalorder %s75, %s76
      %p88 = scmp.eq.s32.totalorder %s24, 2
      %p89 = por %p87, %p88
      %p91 = scmp.ne.s32.totalorder %s76, %s90
      %p92 = scmp.eq.s32.totalorder %s24, 0
      %p93 = por %p91, %p92
      %s95 = sadd.s32 %s94, 1
      %p98 = scmp.eq.s32.totalorder %s18, 2
      %p99 = scmp.ne.s32.totalorder %s94, %s96
      %p100 = scmp.eq.s32.totalorder %s18, 0
      %p101 = por %p99, %p100
      %p102 = scmp.ne.s32.totalorder %s94, %s96
      %p103 = scmp.eq.s32.totalorder %s23, 2
      %p104 = por %p102, %p103
      %p105 = scmp.ne.s32.totalorder %s96, %s97
      %p106 = scmp.eq.s32.totalorder %s23, 0
      %p107 = por %p105, %p106
      %p108 = scmp.ne.s32.totalorder %s96, %s97
      %p109 = scmp.eq.s32.totalorder %s24, 2
      %p110 = por %p108, %p109
      %p112 = scmp.ne.s32.totalorder %s97, %s111
      %p113 = scmp.eq.s32.totalorder %s24, 0
      %p114 = por %p112, %p113
      %s116 = sadd.s32 %s115, 1
      %p119 = scmp.eq.s32.totalorder %s18, 2
      %p120 = scmp.ne.s32.totalorder %s115, %s117
      %p121 = scmp.eq.s32.totalorder %s18, 0
      %p122 = por %p120, %p121
      %p123 = scmp.ne.s32.totalorder %s115, %s117
      %p124 = scmp.eq.s32.totalorder %s23, 2
      %p125 = por %p123, %p124
      %p126 = scmp.ne.s32.totalorder %s117, %s118
      %p127 = scmp.eq.s32.totalorder %s23, 0
      %p128 = por %p126, %p127
      %p129 = scmp.ne.s32.totalorder %s117, %s118
      %p130 = scmp.eq.s32.totalorder %s24, 2
      %p131 = por %p129, %p130
      %p133 = scmp.ne.s32.totalorder %s118, %s132
      %p134 = scmp.eq.s32.totalorder %s24, 0
      %p135 = por %p133, %p134
      %s137 = sadd.s32 %s136, 1
      %p140 = scmp.eq.s32.totalorder %s18, 2
      %p141 = scmp.ne.s32.totalorder %s136, %s138
      %p142 = scmp.eq.s32.totalorder %s18, 0
      %p143 = por %p141, %p142
      %p144 = scmp.ne.s32.totalorder %s136, %s138
      %p145 = scmp.eq.s32.totalorder %s23, 2
      %p146 = por %p144, %p145
      %p147 = scmp.ne.s32.totalorder %s138, %s139
      %p148 = scmp.eq.s32.totalorder %s23, 0
      %p149 = por %p147, %p148
      %p150 = scmp.ne.s32.totalorder %s138, %s139
      %p151 = scmp.eq.s32.totalorder %s24, 2
      %p152 = por %p150, %p151
      %p154 = scmp.ne.s32.totalorder %s139, %s153
      %p155 = scmp.eq.s32.totalorder %s24, 0
      %p156 = por %p154, %p155
      %s158 = sadd.s32 %s157, 1
      %p161 = scmp.eq.s32.totalorder %s18, 2
      %p162 = scmp.ne.s32.totalorder %s157, %s159
      %p163 = scmp.eq.s32.totalorder %s18, 0
      %p164 = por %p162, %p163
      %p165 = scmp.ne.s32.totalorder %s157, %s159
      %p166 = scmp.eq.s32.totalorder %s23, 2
      %p167 = por %p165, %p166
      %p168 = scmp.ne.s32.totalorder %s159, %s160
      %p169 = scmp.eq.s32.totalorder %s23, 0
      %p170 = por %p168, %p169
      %p171 = scmp.ne.s32.totalorder %s159, %s160
      %p172 = scmp.eq.s32.totalorder %s24, 2
      %p173 = por %p171, %p172
      %p175 = scmp.ne.s32.totalorder %s160, %s174
      %p176 = scmp.eq.s32.totalorder %s24, 0
      %p177 = por %p175, %p176
      %s178 = ssub.s32 %s18, %s25
      %p179 = scmp.eq.s32.totalorder %s178, 0
      %s181 = sadd.s32 %s180, 1
      %s182 = scalar_select %p179, %s180, %s181
      %p185 = pneg %p179
      %p186 = scmp.eq.s32.totalorder %s18, 2
      %p187 = por %p185, %p186
      %p188 = scmp.ne.s32.totalorder %s180, %s183
      %p189 = scmp.eq.s32.totalorder %s18, 0
      %p190 = por %p188, %p189
      %p191 = scmp.ne.s32.totalorder %s180, %s183
      %p192 = scmp.eq.s32.totalorder %s23, 2
      %p193 = por %p191, %p192
      %p194 = scmp.ne.s32.totalorder %s183, %s184
      %p195 = scmp.eq.s32.totalorder %s23, 0
      %p196 = por %p194, %p195
      %p197 = scmp.ne.s32.totalorder %s183, %s184
      %p198 = scmp.eq.s32.totalorder %s24, 2
      %p199 = por %p197, %p198
      %p201 = scmp.ne.s32.totalorder %s184, %s200
      %p202 = scmp.eq.s32.totalorder %s24, 0
      %p203 = por %p201, %p202
      %p204 = scmp.le.s32.totalorder 1, %s18
      %p205 = scmp.lt.s32.totalorder %s18, 4
      %p206 = pnand %p204, %p205
      %p207 = pneg %p206
      // Predicated region
      $region9: #{tpu_custom_call.1} parent=5 // pred_check
        _
      $region10: #{tpu_custom_call.1} parent=5 // pred_check_branch
        %209 = sbr.rel (%p206) target = $region12
      $region11: #{tpu_custom_call.1} parent=5 // pred_region
        %s210 = ssub.s32 %s18, 1
        // Predicated region
        $region13: #{tpu_custom_call.1} parent=11 // pred_check
          %p211 = pneg %p65
        $region14: #{tpu_custom_call.1} parent=11 // pred_check_branch
          %213 = sbr.rel (%p211) target = $region16
        $region15: #{tpu_custom_call.1} parent=11 // pred_region
          %s215 = ssub.s32 256, 256
          %216 = vsyncadd [#allocation6], %s215
          %s217 = sshll.u32 [#allocation5], 4
          %s218 = int_to_ptr.vmem [resolvable:$true] %s217
          %223 = dma.hbm_to_vmem [thread:$0]  %s1, 256, %s218, [#allocation6], 64, 64, 4
        $region16: #{tpu_custom_call.1} parent=11 // pred_fallthru
          _
        // Predicated region
        $region17: #{tpu_custom_call.1} parent=11 // pred_check
          %p224 = pneg %p86
        $region18: #{tpu_custom_call.1} parent=11 // pred_check_branch
          %226 = sbr.rel (%p224) target = $region20
        $region19: #{tpu_custom_call.1} parent=11 // pred_region
          _
        $region20: #{tpu_custom_call.1} parent=11 // pred_fallthru
          _
        // Predicated region
        $region21: #{tpu_custom_call.1} parent=11 // pred_check
          %p227 = pneg %p107
        $region22: #{tpu_custom_call.1} parent=11 // pred_check_branch
          %229 = sbr.rel (%p227) target = $region24
        $region23: #{tpu_custom_call.1} parent=11 // pred_region
          %s231 = ssub.s32 1024, 1024
          %232 = vsyncadd [#allocation6], %s231
          %s233 = sshll.u32 [#allocation7], 4
          %s234 = int_to_ptr.vmem [resolvable:$true] %s233
          %239 = dma.hbm_to_vmem [thread:$0]  %s3, 1024, %s234, [#allocation6], 64, 64, 4
        $region24: #{tpu_custom_call.1} parent=11 // pred_fallthru
          _
        // Predicated region
        $region25: #{tpu_custom_call.1} parent=11 // pred_check
          %p240 = pneg %p128
        $region26: #{tpu_custom_call.1} parent=11 // pred_check_branch
          %242 = sbr.rel (%p240) target = $region28
        $region27: #{tpu_custom_call.1} parent=11 // pred_region
          _
        $region28: #{tpu_custom_call.1} parent=11 // pred_fallthru
          _
        // Predicated region
        $region29: #{tpu_custom_call.1} parent=11 // pred_check
          %p243 = pneg %p149
        $region30: #{tpu_custom_call.1} parent=11 // pred_check_branch
          %245 = sbr.rel (%p243) target = $region32
        $region31: #{tpu_custom_call.1} parent=11 // pred_region
          _
        $region32: #{tpu_custom_call.1} parent=11 // pred_fallthru
          _
        // Predicated region
        $region33: #{tpu_custom_call.1} parent=11 // pred_check
          %p246 = pneg %p170
        $region34: #{tpu_custom_call.1} parent=11 // pred_check_branch
          %248 = sbr.rel (%p246) target = $region36
        $region35: #{tpu_custom_call.1} parent=11 // pred_region
          _
        $region36: #{tpu_custom_call.1} parent=11 // pred_fallthru
          _
      $region12: #{tpu_custom_call.1} parent=5 // pred_fallthru
        _
      %p249 = scmp.lt.s32.totalorder %s18, 3
      // Predicated region
      $region37: #{tpu_custom_call.1} parent=5 // pred_check
        %p250 = pneg %p249
      $region38: #{tpu_custom_call.1} parent=5 // pred_check_branch
        %252 = sbr.rel (%p250) target = $region40
      $region39: #{tpu_custom_call.1} parent=5 // pred_region
        // Predicated region
        $region41: #{tpu_custom_call.1} parent=39 // pred_check
          %p253 = pneg %p38
        $region42: #{tpu_custom_call.1} parent=39 // pred_check_branch
          %255 = sbr.rel (%p253) target = $region44
        $region43: #{tpu_custom_call.1} parent=39 // pred_region
          %s256 = sand.u32 %s28, 1
          %s257 = scalar_lea.sflag [#allocation4], %s256
          %s258 = sand.u32 %s28, 1
          %s259 = smul.addr %s258, 8
          %s260 = scalar_lea.vmem [#allocation3], %s259
          %s262 = ssub.s32 128, 128
          %263 = vsyncadd %s257, %s262
          %s264 = smul.addr %s18, 128
          %s265 = scalar_lea.hbm %s0, %s264
          %s267 = sshll.u32 %s260, 4
          %s268 = int_to_ptr.vmem [resolvable:$true] %s267
          %270 = dma.hbm_to_vmem [thread:$0]  %s265, 128, %s268, %s257
        $region44: #{tpu_custom_call.1} parent=39 // pred_fallthru
          _
      $region40: #{tpu_custom_call.1} parent=5 // pred_fallthru
        _
      %p271 = scmp.le.s32.totalorder 1, %s18
      %p272 = scmp.lt.s32.totalorder %s18, 4
      %p273 = pnand %p271, %p272
      %p274 = pneg %p273
      // Predicated region
      $region45: #{tpu_custom_call.1} parent=5 // pred_check
        _
      $region46: #{tpu_custom_call.1} parent=5 // pred_check_branch
        %276 = sbr.rel (%p273) target = $region48
      $region47: #{tpu_custom_call.1} parent=5 // pred_region
        %s277 = ssub.s32 %s18, 1
        %s278 = sand.u32 %s31, 1
        %s279 = scalar_lea.sflag [#allocation4], %s278
        %s280 = sand.u32 %s31, 1
        %s281 = smul.addr %s280, 8
        %s282 = scalar_lea.vmem [#allocation3], %s281
        // Predicated region
        $region49: #{tpu_custom_call.1} parent=47 // pred_check
          %p283 = pneg %p44
        $region50: #{tpu_custom_call.1} parent=47 // pred_check_branch
          %285 = sbr.rel (%p283) target = $region52
        $region51: #{tpu_custom_call.1} parent=47 // pred_region
          %286 = dma.done %s279, 128
        $region52: #{tpu_custom_call.1} parent=47 // pred_fallthru
          _
        // Predicated region
        $region53: #{tpu_custom_call.1} parent=47 // pred_check
          %p287 = pneg %p65
        $region54: #{tpu_custom_call.1} parent=47 // pred_check_branch
          %289 = sbr.rel (%p287) target = $region56
        $region55: #{tpu_custom_call.1} parent=47 // pred_region
          %290 = dma.done [#allocation6], 256
        $region56: #{tpu_custom_call.1} parent=47 // pred_fallthru
          _
        // Predicated region
        $region57: #{tpu_custom_call.1} parent=47 // pred_check
          %p291 = pneg %p107
        $region58: #{tpu_custom_call.1} parent=47 // pred_check_branch
          %293 = sbr.rel (%p291) target = $region60
        $region59: #{tpu_custom_call.1} parent=47 // pred_region
          %294 = dma.done [#allocation6], 1024
        $region60: #{tpu_custom_call.1} parent=47 // pred_fallthru
          _
        %s295 = sand.u32 %s31, 1
        %s296 = scalar_lea.sflag [#allocation4], %s295
        %s297 = sand.u32 %s31, 1
        %s298 = smul.addr %s297, 8
        %s299 = scalar_lea.vmem [#allocation3], %s298
        %p300 = pneg %p44
        %p301 = pneg %p41
        %p302 = pneg %p65
        %p303 = pneg %p62
        %p304 = pneg %p86
        %p305 = pneg %p83
        %p306 = pneg %p107
        %p307 = pneg %p104
        %p308 = pneg %p128
        %p309 = pneg %p125
        %p310 = pneg %p149
        %p311 = pneg %p146
        %p312 = pneg %p170
        %p313 = pneg %p167
        %p314 = pneg %p196
        %p315 = pneg %p193
        %p316 = scmp.lt.s32.totalorder %s23, 2
        %s317 = scalar_select %p316, %s23, 2
        %s318 = smul.addr %s317, 8
        %s319 = scalar_lea.vmem %s7, %s318
        %p320 = scmp.lt.s32.totalorder %s23, 2
        %s321 = scalar_select %p320, %s23, 2
        %s322 = smul.addr %s321, 8
        %s323 = scalar_lea.vmem %s7, %s322
        %v325 = vld [vmem:[%s282] sm:$0xff]
        %v326 = vpack.c.bf16 %v325, %v325
        %v327 = vld [vmem:[#allocation5] sm:$0xf]
        %v328 = vld [vmem:[#allocation5 + $0x4] sm:$0xf]
        %v329 = vld [vmem:[#allocation5 + $0x8] sm:$0xf]
        %v330 = vld [vmem:[#allocation5 + $0xc] sm:$0xf]
        %v331 = vld [vmem:[%s2] sm:$0x1]
        %v333 = vlaneseq
        %v334 = vshrl.u32 %v333, 7
        %v335 = vsub.s32 0, %v334
        %v336 = vrot.slane %v331, %v335
        %v342 = vunpack.c.l.b16 %v327
        %v343 = vunpack.c.l.b16 %v328
        %v344 = vunpack.c.l.b16 %v329
        %v345 = vunpack.c.l.b16 %v330
        %v346 = vpack.c.b16 %v343, %v342
        %v347 = vpack.c.b16 %v345, %v344
        %vm350 = vcmask 261120
        %v352 = vsel %vm350, %v326, 0
        %354 = vmatprep.subr.bf16.mxu0 0
        %355 = vmatpush1.bf16.msra.mxu0 %v346
        %356 = vmatprep.subr.bf16.mxu0 0
        %357 = vmatpush1.bf16.msra.mxu0 %v347
        %358 = vmatprep.subr.bf16.mxu0 0
        %359 = vmatpush1.bf16.msra.mxu0 0
        %360 = vmatprep.subr.bf16.mxu0 0
        %361 = vmatpush1.bf16.msra.mxu0 0
        %362 = vmatprep.subr.bf16.mxu0 0
        %363 = vmatpush1.bf16.msra.mxu0 0
        %364 = vmatprep.subr.bf16.mxu0 0
        %365 = vmatpush1.bf16.msra.mxu0 0
        %366 = vmatprep.subr.bf16.mxu0 0
        %367 = vmatpush1.bf16.msra.mxu0 0
        %368 = vmatprep.subr.bf16.mxu0 0
        %369 = vmatpush1.bf16.msra.mxu0 0
        %370 = vmatprep.subr.bf16.mxu0 0
        %371 = vmatpush1.bf16.msra.mxu0 0
        %372 = vmatprep.subr.bf16.mxu0 0
        %373 = vmatpush1.bf16.msra.mxu0 0
        %374 = vmatprep.subr.bf16.mxu0 0
        %375 = vmatpush1.bf16.msra.mxu0 0
        %376 = vmatprep.subr.bf16.mxu0 0
        %377 = vmatpush1.bf16.msra.mxu0 0
        %378 = vmatprep.subr.bf16.mxu0 0
        %379 = vmatpush1.bf16.msra.mxu0 0
        %380 = vmatprep.subr.bf16.mxu0 0
        %381 = vmatpush1.bf16.msra.mxu0 0
        %382 = vmatprep.subr.bf16.mxu0 0
        %383 = vmatpush1.bf16.msra.mxu0 0
        %384 = vmatprep.subr.bf16.mxu0 0
        %385 = vmatpush1.bf16.msra.mxu0 0
        %386 = vmatprep.mubr.bf16.mxu0 0
        %387 = vmatmul.mubr.bf16.gmra.mrb[0].mxu0 %v352
        %v388 = vpop.f32.mrb[0].mxu0
        %v389 = vadd.f32 %v336, %v388
        %v390 = vpop.f32.mrb[0].mxu0
        %v391 = vpop.f32.mrb[0].mxu0
        %v392 = vpop.f32.mrb[0].mxu0
        %393 = vdwg.mxu0
        %v394 = vmax.f32 %v389, 0.0
        %v395 = vpack.c.bf16 %v394, %v394
        %v396 = vld [vmem:[#allocation7] sm:$0xf]
        %v397 = vld [vmem:[#allocation7 + $0x4] sm:$0xf]
        %v398 = vld [vmem:[#allocation7 + $0x8] sm:$0xf]
        %v399 = vld [vmem:[#allocation7 + $0xc] sm:$0xf]
        %v400 = vld [vmem:[#allocation7 + $0x10] sm:$0xf]
        %v401 = vld [vmem:[#allocation7 + $0x14] sm:$0xf]
        %v402 = vld [vmem:[#allocation7 + $0x18] sm:$0xf]
        %v403 = vld [vmem:[#allocation7 + $0x1c] sm:$0xf]
        %v404 = vld [vmem:[#allocation7 + $0x20] sm:$0xf]
        %v405 = vld [vmem:[#allocation7 + $0x24] sm:$0xf]
        %v406 = vld [vmem:[#allocation7 + $0x28] sm:$0xf]
        %v407 = vld [vmem:[#allocation7 + $0x2c] sm:$0xf]
        %v408 = vld [vmem:[#allocation7 + $0x30] sm:$0xf]
        %v409 = vld [vmem:[#allocation7 + $0x34] sm:$0xf]
        %v410 = vld [vmem:[#allocation7 + $0x38] sm:$0xf]
        %v411 = vld [vmem:[#allocation7 + $0x3c] sm:$0xf]
        %v412 = vld [vmem:[%s4] sm:$0x1]
        %v414 = vlaneseq
        %v415 = vshrl.u32 %v414, 7
        %v416 = vsub.s32 0, %v415
        %v417 = vrot.slane %v412, %v416
        %v435 = vunpack.c.l.b16 %v396
        %v436 = vunpack.c.l.b16 %v397
        %v437 = vunpack.c.l.b16 %v398
        %v438 = vunpack.c.l.b16 %v399
        %v439 = vunpack.c.l.b16 %v400
        %v440 = vunpack.c.l.b16 %v401
        %v441 = vunpack.c.l.b16 %v402
        %v442 = vunpack.c.l.b16 %v403
        %v443 = vunpack.c.l.b16 %v404
        %v444 = vunpack.c.l.b16 %v405
        %v445 = vunpack.c.l.b16 %v406
        %v446 = vunpack.c.l.b16 %v407
        %v447 = vunpack.c.l.b16 %v408
        %v448 = vunpack.c.l.b16 %v409
        %v449 = vunpack.c.l.b16 %v410
        %v450 = vunpack.c.l.b16 %v411
        %v451 = vpack.c.b16 %v436, %v435
        %v452 = vpack.c.b16 %v438, %v437
        %v453 = vpack.c.b16 %v440, %v439
        %v454 = vpack.c.b16 %v442, %v441
        %v455 = vpack.c.b16 %v444, %v443
        %v456 = vpack.c.b16 %v446, %v445
        %v457 = vpack.c.b16 %v448, %v447
        %v458 = vpack.c.b16 %v450, %v449
        %467 = vmatprep.subr.bf16.mxu0 0
        %468 = vmatpush1.bf16.msra.mxu0 %v451
        %469 = vmatprep.subr.bf16.mxu0 0
        %470 = vmatpush1.bf16.msra.mxu0 %v452
        %471 = vmatprep.subr.bf16.mxu0 0
        %472 = vmatpush1.bf16.msra.mxu0 %v453
        %473 = vmatprep.subr.bf16.mxu0 0
        %474 = vmatpush1.bf16.msra.mxu0 %v454
        %475 = vmatprep.subr.bf16.mxu0 0
        %476 = vmatpush1.bf16.msra.mxu0 %v455
        %477 = vmatprep.subr.bf16.mxu0 0
        %478 = vmatpush1.bf16.msra.mxu0 %v456
        %479 = vmatprep.subr.bf16.mxu0 0
        %480 = vmatpush1.bf16.msra.mxu0 %v457
        %481 = vmatprep.subr.bf16.mxu0 0
        %482 = vmatpush1.bf16.msra.mxu0 %v458
        %483 = vmatprep.subr.bf16.mxu0 0
        %484 = vmatpush1.bf16.msra.mxu0 0
        %485 = vmatprep.subr.bf16.mxu0 0
        %486 = vmatpush1.bf16.msra.mxu0 0
        %487 = vmatprep.subr.bf16.mxu0 0
        %488 = vmatpush1.bf16.msra.mxu0 0
        %489 = vmatprep.subr.bf16.mxu0 0
        %490 = vmatpush1.bf16.msra.mxu0 0
        %491 = vmatprep.subr.bf16.mxu0 0
        %492 = vmatpush1.bf16.msra.mxu0 0
        %493 = vmatprep.subr.bf16.mxu0 0
        %494 = vmatpush1.bf16.msra.mxu0 0
        %495 = vmatprep.subr.bf16.mxu0 0
        %496 = vmatpush1.bf16.msra.mxu0 0
        %497 = vmatprep.subr.bf16.mxu0 0
        %498 = vmatpush1.bf16.msra.mxu0 0
        %499 = vmatprep.mubr.bf16.mxu0 0
        %500 = vmatmul.mubr.bf16.gmra.mrb[0].mxu0 %v395
        %v501 = vpop.f32.mrb[0].mxu0
        %v502 = vadd.f32 %v417, %v501
        %v503 = vpop.f32.mrb[0].mxu0
        %v504 = vpop.f32.mrb[0].mxu0
        %v505 = vpop.f32.mrb[0].mxu0
        %506 = vdwg.mxu0
        %v507 = vmax.f32 %v502, 0.0
        %v508 = vld [vmem:[%s5] sm:$0x1]
        %v510 = vlaneseq
        %v511 = vshrl.u32 %v510, 7
        %v512 = vsub.s32 0, %v511
        %v513 = vrot.slane %v508, %v512
        %v515 = vmul.f32 %v507, %v513
        %516 = vadd.xlane.f32.xlu0 %v515
        %v517 = vpop.xlane.xlu0 %516
        %s518 = sld [smem:[#allocation2]]
        %v519 = vstv %s518
        %v520 = vadd.f32 %v517, %v519
        %v521 = vxor.u32 %v520, 2147483648
        %v522 = vmul.f32 %v521, 1.442695
        %v523 = vpow.pop %v522
        %v524 = vadd.f32 %v523, 1.0
        %v525 = vrcp.pop %v524
        %v526 = vmul.f32 1.0, %v525
        %vm527 = vcmask 7168
        %528 = vst.msk [vmem:[%s323] sm:$0xff] %vm527, %v526
        %p529 = scmp.lt.s32.totalorder %s23, 2
        %s530 = scalar_select %p529, %s23, 2
        %s531 = smul.addr %s530, 8
        %s532 = scalar_lea.vmem %s7, %s531
        // Predicated region
        $region61: #{tpu_custom_call.1} parent=47 // pred_check
          %p533 = pneg %p193
        $region62: #{tpu_custom_call.1} parent=47 // pred_check_branch
          %535 = sbr.rel (%p533) target = $region64
        $region63: #{tpu_custom_call.1} parent=47 // pred_region
          _
        $region64: #{tpu_custom_call.1} parent=47 // pred_fallthru
          _
      $region48: #{tpu_custom_call.1} parent=5 // pred_fallthru
        _
      %p536 = scmp.le.s32.totalorder 2, %s18
      // Predicated region
      $region65: #{tpu_custom_call.1} parent=5 // pred_check
        %p537 = pneg %p536
      $region66: #{tpu_custom_call.1} parent=5 // pred_check_branch
        %539 = sbr.rel (%p537) target = $region68
      $region67: #{tpu_custom_call.1} parent=5 // pred_region
        %s540 = ssub.s32 %s18, 2
        // Predicated region
        $region69: #{tpu_custom_call.1} parent=67 // pred_check
          %p541 = pneg %p199
        $region70: #{tpu_custom_call.1} parent=67 // pred_check_branch
          %543 = sbr.rel (%p541) target = $region72
        $region71: #{tpu_custom_call.1} parent=67 // pred_region
          %p544 = scmp.lt.s32.totalorder %s24, 2
          %s545 = scalar_select %p544, %s24, 2
          %s546 = smul.addr %s545, 8
          %s547 = scalar_lea.vmem %s7, %s546
        $region72: #{tpu_custom_call.1} parent=67 // pred_fallthru
          _
      $region68: #{tpu_custom_call.1} parent=5 // pred_fallthru
        _
    $region6: #{tpu_custom_call.1} parent=1 // loop_footer
      %s22 = sadd.s32 1, %s18
    $region7: #{tpu_custom_call.1} parent=1 // loop_footer_branch
      %17 = sbr.rel target = $region3
    $region8: #{tpu_custom_call.1} parent=1 // loop_exit
      _
    %548 = vsyncpa [#allocation4], 1
    %s549 = scalar_lea.sflag [#allocation4], 1
    %550 = vsyncpa %s549, 1
    %551 = vsyncpa [#allocation6], 1

// kernel: tpu_custom_call.1
$region0: #{tpu_custom_call.1}
  #allocation0 [shape = 'u32[]', space=smem, size = 0x4, offset = 0x4, fixed_abs, tag = 'smem constant byte address 0x4 - core index']
  #allocation1 [shape = 'u32[144,128]{1,0:T(1,128)}', space=vmem, size = 0x12000, scoped, tag = 'internal scratch']
  #allocation2 [shape = 'f32[1,1]{1,0:T(1,128)S(6)}', space=smem, size = 0x200, scoped, tag = 'scoped memory for tpu_custom_call.1']
  %s0 = inlined_call_operand.hbm [shape: f32[20,32], index: 0, kind: input, shape index: {}]
  %s1 = inlined_call_operand.hbm [shape: bf16[32,128], index: 1, kind: input, shape index: {}]
  %s2 = inlined_call_operand.vmem [shape: f32[1,128], index: 2, kind: input, shape index: {}]
  %s3 = inlined_call_operand.hbm [shape: bf16[128,128], index: 3, kind: input, shape index: {}]
  %s4 = inlined_call_operand.vmem [shape: f32[1,128], index: 4, kind: input, shape index: {}]
  %s5 = inlined_call_operand.vmem [shape: f32[1,128], index: 5, kind: input, shape index: {}]
  %s6 = inlined_call_operand.<no memory space> [shape: f32[1,1], index: 6, kind: input, shape index: {}]
  %s7 = inlined_call_operand.vmem [shape: f32[20,1], index: 7, kind: output, shape index: {}]
  %s8 = sld [smem:[#allocation0]]
  $region73: #{tpu_custom_call.1} parent=0
    _
  %s10 = ssub.s32 1, %s8
  %s11 = scalar_select 0, %s10, %s8
  %12 = sst [smem:[#allocation2]] %s6
  $region1: #{tpu_custom_call.1} parent=0
    #allocation3 [shape = 'u8[8192]{0}', space=vmem, size = 0x2000, scoped, tag = 'input window, operand 0']
    #allocation4 [shape = 's32[2]{0}', space=sflag, size = 0x8, scoped, tag = 'scoped memory for tpu_custom_call.1']
    #allocation5 [shape = 'u8[8192]{0}', space=vmem, size = 0x2000, scoped, tag = 'input window, operand 1, single buffered']
    #allocation6 [shape = 's32[1]{0}', space=sflag, size = 0x4, scoped, tag = 'scoped memory for tpu_custom_call.1']
    #allocation7 [shape = 'u8[32768]{0}', space=vmem, size = 0x8000, scoped, tag = 'input window, operand 3, single buffered']
    %13 = vsyncpa [#allocation4], 0
    %s14 = scalar_lea.sflag [#allocation4], 1
    %15 = vsyncpa %s14, 0
    %16 = vsyncpa [#allocation6], 0
    loop: start=0, step=1, limit=5
    $region2: #{tpu_custom_call.1} parent=1 // loop_pre_header
      _
    $region3: #{tpu_custom_call.1} parent=1 // loop_header
      %s18 = sphi 0, %s22
      %p19 = scmp.ge.s32.totalorder %s18, 5
      %s28 = sphi 0, %s30
      %s31 = sphi 0, %s28
      %s32 = sphi 0, %s31
      %s48 = sphi 0, %s32
      %s52 = sphi 0, %s52
      %s54 = sphi 0, %s52
      %s55 = sphi 0, %s54
      %s69 = sphi 0, %s55
      %s73 = sphi 0, %s73
      %s75 = sphi 0, %s73
      %s76 = sphi 0, %s75
      %s90 = sphi 0, %s76
      %s94 = sphi 0, %s94
      %s96 = sphi 0, %s94
      %s97 = sphi 0, %s96
      %s111 = sphi 0, %s97
      %s115 = sphi 0, %s115
      %s117 = sphi 0, %s115
      %s118 = sphi 0, %s117
      %s132 = sphi 0, %s118
      %s136 = sphi 0, %s136
      %s138 = sphi 0, %s136
      %s139 = sphi 0, %s138
      %s153 = sphi 0, %s139
      %s157 = sphi 0, %s157
      %s159 = sphi 0, %s157
      %s160 = sphi 0, %s159
      %s174 = sphi 0, %s160
      %s180 = sphi 0, %s182
      %s183 = sphi 0, %s180
      %s184 = sphi 0, %s183
      %s200 = sphi 0, %s184
    $region4: #{tpu_custom_call.1} parent=1 // loop_header_branch
      %21 = sbr.rel (%p19) target = $region8
    $region5: #{tpu_custom_call.1} parent=1 // loop_body
      %s23 = ssub.s32 %s18, 1
      %s24 = ssub.s32 %s18, 2
      %s25 = sadd.s32 %s18, 1
      %s26 = ssub.s32 %s18, %s25
      %p27 = scmp.eq.s32.totalorder %s26, 0
      %s29 = sadd.s32 %s28, 1
      %s30 = scalar_select %p27, %s28, %s29
      %p33 = pneg %p27
      %p34 = scmp.eq.s32.totalorder %s18, 2
      %p35 = por %p33, %p34
      %p36 = scmp.ne.s32.totalorder %s28, %s31
      %p37 = scmp.eq.s32.totalorder %s18, 0
      %p38 = por %p36, %p37
      %p39 = scmp.ne.s32.totalorder %s28, %s31
      %p40 = scmp.eq.s32.totalorder %s23, 2
      %p41 = por %p39, %p40
      %p42 = scmp.ne.s32.totalorder %s31, %s32
      %p43 = scmp.eq.s32.totalorder %s23, 0
      %p44 = por %p42, %p43
      %p45 = scmp.ne.s32.totalorder %s31, %s32
      %p46 = scmp.eq.s32.totalorder %s24, 2
      %p47 = por %p45, %p46
      %p49 = scmp.ne.s32.totalorder %s32, %s48
      %p50 = scmp.eq.s32.totalorder %s24, 0
      %p51 = por %p49, %p50
      %s53 = sadd.s32 %s52, 1
      %p56 = scmp.eq.s32.totalorder %s18, 2
      %p57 = scmp.ne.s32.totalorder %s52, %s54
      %p58 = scmp.eq.s32.totalorder %s18, 0
      %p59 = por %p57, %p58
      %p60 = scmp.ne.s32.totalorder %s52, %s54
      %p61 = scmp.eq.s32.totalorder %s23, 2
      %p62 = por %p60, %p61
      %p63 = scmp.ne.s32.totalorder %s54, %s55
      %p64 = scmp.eq.s32.totalorder %s23, 0
      %p65 = por %p63, %p64
      %p66 = scmp.ne.s32.totalorder %s54, %s55
      %p67 = scmp.eq.s32.totalorder %s24, 2
      %p68 = por %p66, %p67
      %p70 = scmp.ne.s32.totalorder %s55, %s69
      %p71 = scmp.eq.s32.totalorder %s24, 0
      %p72 = por %p70, %p71
      %s74 = sadd.s32 %s73, 1
      %p77 = scmp.eq.s32.totalorder %s18, 2
      %p78 = scmp.ne.s32.totalorder %s73, %s75
      %p79 = scmp.eq.s32.totalorder %s18, 0
      %p80 = por %p78, %p79
      %p81 = scmp.ne.s32.totalorder %s73, %s75
      %p82 = scmp.eq.s32.totalorder %s23, 2
      %p83 = por %p81, %p82
      %p84 = scmp.ne.s32.totalorder %s75, %s76
      %p85 = scmp.eq.s32.totalorder %s23, 0
      %p86 = por %p84, %p85
      %p87 = scmp.ne.s32.totalorder %s75, %s76
      %p88 = scmp.eq.s32.totalorder %s24, 2
      %p89 = por %p87, %p88
      %p91 = scmp.ne.s32.totalorder %s76, %s90
      %p92 = scmp.eq.s32.totalorder %s24, 0
      %p93 = por %p91, %p92
      %s95 = sadd.s32 %s94, 1
      %p98 = scmp.eq.s32.totalorder %s18, 2
      %p99 = scmp.ne.s32.totalorder %s94, %s96
      %p100 = scmp.eq.s32.totalorder %s18, 0
      %p101 = por %p99, %p100
      %p102 = scmp.ne.s32.totalorder %s94, %s96
      %p103 = scmp.eq.s32.totalorder %s23, 2
      %p104 = por %p102, %p103
      %p105 = scmp.ne.s32.totalorder %s96, %s97
      %p106 = scmp.eq.s32.totalorder %s23, 0
      %p107 = por %p105, %p106
      %p108 = scmp.ne.s32.totalorder %s96, %s97
      %p109 = scmp.eq.s32.totalorder %s24, 2
      %p110 = por %p108, %p109
      %p112 = scmp.ne.s32.totalorder %s97, %s111
      %p113 = scmp.eq.s32.totalorder %s24, 0
      %p114 = por %p112, %p113
      %s116 = sadd.s32 %s115, 1
      %p119 = scmp.eq.s32.totalorder %s18, 2
      %p120 = scmp.ne.s32.totalorder %s115, %s117
      %p121 = scmp.eq.s32.totalorder %s18, 0
      %p122 = por %p120, %p121
      %p123 = scmp.ne.s32.totalorder %s115, %s117
      %p124 = scmp.eq.s32.totalorder %s23, 2
      %p125 = por %p123, %p124
      %p126 = scmp.ne.s32.totalorder %s117, %s118
      %p127 = scmp.eq.s32.totalorder %s23, 0
      %p128 = por %p126, %p127
      %p129 = scmp.ne.s32.totalorder %s117, %s118
      %p130 = scmp.eq.s32.totalorder %s24, 2
      %p131 = por %p129, %p130
      %p133 = scmp.ne.s32.totalorder %s118, %s132
      %p134 = scmp.eq.s32.totalorder %s24, 0
      %p135 = por %p133, %p134
      %s137 = sadd.s32 %s136, 1
      %p140 = scmp.eq.s32.totalorder %s18, 2
      %p141 = scmp.ne.s32.totalorder %s136, %s138
      %p142 = scmp.eq.s32.totalorder %s18, 0
      %p143 = por %p141, %p142
      %p144 = scmp.ne.s32.totalorder %s136, %s138
      %p145 = scmp.eq.s32.totalorder %s23, 2
      %p146 = por %p144, %p145
      %p147 = scmp.ne.s32.totalorder %s138, %s139
      %p148 = scmp.eq.s32.totalorder %s23, 0
      %p149 = por %p147, %p148
      %p150 = scmp.ne.s32.totalorder %s138, %s139
      %p151 = scmp.eq.s32.totalorder %s24, 2
      %p152 = por %p150, %p151
      %p154 = scmp.ne.s32.totalorder %s139, %s153
      %p155 = scmp.eq.s32.totalorder %s24, 0
      %p156 = por %p154, %p155
      %s158 = sadd.s32 %s157, 1
      %p161 = scmp.eq.s32.totalorder %s18, 2
      %p162 = scmp.ne.s32.totalorder %s157, %s159
      %p163 = scmp.eq.s32.totalorder %s18, 0
      %p164 = por %p162, %p163
      %p165 = scmp.ne.s32.totalorder %s157, %s159
      %p166 = scmp.eq.s32.totalorder %s23, 2
      %p167 = por %p165, %p166
      %p168 = scmp.ne.s32.totalorder %s159, %s160
      %p169 = scmp.eq.s32.totalorder %s23, 0
      %p170 = por %p168, %p169
      %p171 = scmp.ne.s32.totalorder %s159, %s160
      %p172 = scmp.eq.s32.totalorder %s24, 2
      %p173 = por %p171, %p172
      %p175 = scmp.ne.s32.totalorder %s160, %s174
      %p176 = scmp.eq.s32.totalorder %s24, 0
      %p177 = por %p175, %p176
      %s178 = ssub.s32 %s18, %s25
      %p179 = scmp.eq.s32.totalorder %s178, 0
      %s181 = sadd.s32 %s180, 1
      %s182 = scalar_select %p179, %s180, %s181
      %p185 = pneg %p179
      %p186 = scmp.eq.s32.totalorder %s18, 2
      %p187 = por %p185, %p186
      %p188 = scmp.ne.s32.totalorder %s180, %s183
      %p189 = scmp.eq.s32.totalorder %s18, 0
      %p190 = por %p188, %p189
      %p191 = scmp.ne.s32.totalorder %s180, %s183
      %p192 = scmp.eq.s32.totalorder %s23, 2
      %p193 = por %p191, %p192
      %p194 = scmp.ne.s32.totalorder %s183, %s184
      %p195 = scmp.eq.s32.totalorder %s23, 0
      %p196 = por %p194, %p195
      %p197 = scmp.ne.s32.totalorder %s183, %s184
      %p198 = scmp.eq.s32.totalorder %s24, 2
      %p199 = por %p197, %p198
      %p201 = scmp.ne.s32.totalorder %s184, %s200
      %p202 = scmp.eq.s32.totalorder %s24, 0
      %p203 = por %p201, %p202
      %p204 = scmp.le.s32.totalorder 1, %s18
      %p205 = scmp.lt.s32.totalorder %s18, 4
      %p206 = pnand %p204, %p205
      %p207 = pneg %p206
      // Predicated region
      $region9: #{tpu_custom_call.1} parent=5 // pred_check
        _
      $region10: #{tpu_custom_call.1} parent=5 // pred_check_branch
        %209 = sbr.rel (%p206) target = $region12
      $region11: #{tpu_custom_call.1} parent=5 // pred_region
        %s210 = ssub.s32 %s18, 1
        // Predicated region
        $region13: #{tpu_custom_call.1} parent=11 // pred_check
          %p211 = pneg %p65
        $region14: #{tpu_custom_call.1} parent=11 // pred_check_branch
          %213 = sbr.rel (%p211) target = $region16
        $region15: #{tpu_custom_call.1} parent=11 // pred_region
          %s215 = ssub.s32 256, 256
          %216 = vsyncadd [#allocation6], %s215
          %s217 = sshll.u32 [#allocation5], 4
          %s218 = int_to_ptr.vmem [resolvable:$true] %s217
          %223 = dma.hbm_to_vmem [thread:$0]  %s1, 256, %s218, [#allocation6], 64, 64, 4
        $region16: #{tpu_custom_call.1} parent=11 // pred_fallthru
          _
        // Predicated region
        $region17: #{tpu_custom_call.1} parent=11 // pred_check
          %p224 = pneg %p86
        $region18: #{tpu_custom_call.1} parent=11 // pred_check_branch
          %226 = sbr.rel (%p224) target = $region20
        $region19: #{tpu_custom_call.1} parent=11 // pred_region
          _
        $region20: #{tpu_custom_call.1} parent=11 // pred_fallthru
          _
        // Predicated region
        $region21: #{tpu_custom_call.1} parent=11 // pred_check
          %p227 = pneg %p107
        $region22: #{tpu_custom_call.1} parent=11 // pred_check_branch
          %229 = sbr.rel (%p227) target = $region24
        $region23: #{tpu_custom_call.1} parent=11 // pred_region
          %s231 = ssub.s32 1024, 1024
          %232 = vsyncadd [#allocation6], %s231
          %s233 = sshll.u32 [#allocation7], 4
          %s234 = int_to_ptr.vmem [resolvable:$true] %s233
          %239 = dma.hbm_to_vmem [thread:$0]  %s3, 1024, %s234, [#allocation6], 64, 64, 4
        $region24: #{tpu_custom_call.1} parent=11 // pred_fallthru
          _
        // Predicated region
        $region25: #{tpu_custom_call.1} parent=11 // pred_check
          %p240 = pneg %p128
        $region26: #{tpu_custom_call.1} parent=11 // pred_check_branch
          %242 = sbr.rel (%p240) target = $region28
        $region27: #{tpu_custom_call.1} parent=11 // pred_region
          _
        $region28: #{tpu_custom_call.1} parent=11 // pred_fallthru
          _
        // Predicated region
        $region29: #{tpu_custom_call.1} parent=11 // pred_check
          %p243 = pneg %p149
        $region30: #{tpu_custom_call.1} parent=11 // pred_check_branch
          %245 = sbr.rel (%p243) target = $region32
        $region31: #{tpu_custom_call.1} parent=11 // pred_region
          _
        $region32: #{tpu_custom_call.1} parent=11 // pred_fallthru
          _
        // Predicated region
        $region33: #{tpu_custom_call.1} parent=11 // pred_check
          %p246 = pneg %p170
        $region34: #{tpu_custom_call.1} parent=11 // pred_check_branch
          %248 = sbr.rel (%p246) target = $region36
        $region35: #{tpu_custom_call.1} parent=11 // pred_region
          _
        $region36: #{tpu_custom_call.1} parent=11 // pred_fallthru
          _
      $region12: #{tpu_custom_call.1} parent=5 // pred_fallthru
        _
      %p249 = scmp.lt.s32.totalorder %s18, 3
      // Predicated region
      $region37: #{tpu_custom_call.1} parent=5 // pred_check
        %p250 = pneg %p249
      $region38: #{tpu_custom_call.1} parent=5 // pred_check_branch
        %252 = sbr.rel (%p250) target = $region40
      $region39: #{tpu_custom_call.1} parent=5 // pred_region
        // Predicated region
        $region41: #{tpu_custom_call.1} parent=39 // pred_check
          %p253 = pneg %p38
        $region42: #{tpu_custom_call.1} parent=39 // pred_check_branch
          %255 = sbr.rel (%p253) target = $region44
        $region43: #{tpu_custom_call.1} parent=39 // pred_region
          %s256 = sand.u32 %s28, 1
          %s257 = scalar_lea.sflag [#allocation4], %s256
          %s258 = sand.u32 %s28, 1
          %s259 = smul.addr %s258, 8
          %s260 = scalar_lea.vmem [#allocation3], %s259
          %s262 = ssub.s32 128, 128
          %263 = vsyncadd %s257, %s262
          %s264 = smul.addr %s18, 128
          %s265 = scalar_lea.hbm %s0, %s264
          %s267 = sshll.u32 %s260, 4
          %s268 = int_to_ptr.vmem [resolvable:$true] %s267
          %270 = dma.hbm_to_vmem [thread:$0]  %s265, 128, %s268, %s257
        $region44: #{tpu_custom_call.1} parent=39 // pred_fallthru
          _
      $region40: #{tpu_custom_call.1} parent=5 // pred_fallthru
        _
      %p271 = scmp.le.s32.totalorder 1, %s18
      %p272 = scmp.lt.s32.totalorder %s18, 4
      %p273 = pnand %p271, %p272
      %p274 = pneg %p273
      // Predicated region
      $region45: #{tpu_custom_call.1} parent=5 // pred_check
        _
      $region46: #{tpu_custom_call.1} parent=5 // pred_check_branch
        %276 = sbr.rel (%p273) target = $region48
      $region47: #{tpu_custom_call.1} parent=5 // pred_region
        %s277 = ssub.s32 %s18, 1
        %s278 = sand.u32 %s31, 1
        %s279 = scalar_lea.sflag [#allocation4], %s278
        %s280 = sand.u32 %s31, 1
        %s281 = smul.addr %s280, 8
        %s282 = scalar_lea.vmem [#allocation3], %s281
        // Predicated region
        $region49: #{tpu_custom_call.1} parent=47 // pred_check
          %p283 = pneg %p44
        $region50: #{tpu_custom_call.1} parent=47 // pred_check_branch
          %285 = sbr.rel (%p283) target = $region52
        $region51: #{tpu_custom_call.1} parent=47 // pred_region
          %286 = dma.done %s279, 128
        $region52: #{tpu_custom_call.1} parent=47 // pred_fallthru
          _
        // Predicated region
        $region53: #{tpu_custom_call.1} parent=47 // pred_check
          %p287 = pneg %p65
        $region54: #{tpu_custom_call.1} parent=47 // pred_check_branch
          %289 = sbr.rel (%p287) target = $region56
        $region55: #{tpu_custom_call.1} parent=47 // pred_region
          %290 = dma.done [#allocation6], 256
        $region56: #{tpu_custom_call.1} parent=47 // pred_fallthru
          _
        // Predicated region
        $region57: #{tpu_custom_call.1} parent=47 // pred_check
          %p291 = pneg %p107
        $region58: #{tpu_custom_call.1} parent=47 // pred_check_branch
          %293 = sbr.rel (%p291) target = $region60
        $region59: #{tpu_custom_call.1} parent=47 // pred_region
          %294 = dma.done [#allocation6], 1024
        $region60: #{tpu_custom_call.1} parent=47 // pred_fallthru
          _
        %s295 = sand.u32 %s31, 1
        %s296 = scalar_lea.sflag [#allocation4], %s295
        %s297 = sand.u32 %s31, 1
        %s298 = smul.addr %s297, 8
        %s299 = scalar_lea.vmem [#allocation3], %s298
        %p300 = pneg %p44
        %p301 = pneg %p41
        %p302 = pneg %p65
        %p303 = pneg %p62
        %p304 = pneg %p86
        %p305 = pneg %p83
        %p306 = pneg %p107
        %p307 = pneg %p104
        %p308 = pneg %p128
        %p309 = pneg %p125
        %p310 = pneg %p149
        %p311 = pneg %p146
        %p312 = pneg %p170
        %p313 = pneg %p167
        %p314 = pneg %p196
        %p315 = pneg %p193
        %p316 = scmp.lt.s32.totalorder %s23, 2
        %s317 = scalar_select %p316, %s23, 2
        %s318 = smul.addr %s317, 8
        %s319 = scalar_lea.vmem %s7, %s318
        %p320 = scmp.lt.s32.totalorder %s23, 2
        %s321 = scalar_select %p320, %s23, 2
        %s322 = smul.addr %s321, 8
        %s323 = scalar_lea.vmem %s7, %s322
        %v325 = vld [vmem:[%s282] sm:$0xff]
        %v326 = vpack.c.bf16 %v325, %v325
        %v327 = vld [vmem:[#allocation5] sm:$0xf]
        %v328 = vld [vmem:[#allocation5 + $0x4] sm:$0xf]
        %v329 = vld [vmem:[#allocation5 + $0x8] sm:$0xf]
        %v330 = vld [vmem:[#allocation5 + $0xc] sm:$0xf]
        %v331 = vld [vmem:[%s2] sm:$0x1]
        %v333 = vlaneseq
        %v334 = vshrl.u32 %v333, 7
        %v335 = vsub.s32 0, %v334
        %v336 = vrot.slane %v331, %v335
        %v342 = vunpack.c.l.b16 %v327
        %v343 = vunpack.c.l.b16 %v328
        %v344 = vunpack.c.l.b16 %v329
        %v345 = vunpack.c.l.b16 %v330
        %v346 = vpack.c.b16 %v343, %v342
        %v347 = vpack.c.b16 %v345, %v344
        %vm350 = vcmask 261120
        %v352 = vsel %vm350, %v326, 0
        %354 = vmatprep.subr.bf16.mxu0 0
        %355 = vmatpush1.bf16.msra.mxu0 %v346
        %356 = vmatprep.subr.bf16.mxu0 0
        %357 = vmatpush1.bf16.msra.mxu0 %v347
        %358 = vmatprep.subr.bf16.mxu0 0
        %359 = vmatpush1.bf16.msra.mxu0 0
        %360 = vmatprep.subr.bf16.mxu0 0
        %361 = vmatpush1.bf16.msra.mxu0 0
        %362 = vmatprep.subr.bf16.mxu0 0
        %363 = vmatpush1.bf16.msra.mxu0 0
        %364 = vmatprep.subr.bf16.mxu0 0
        %365 = vmatpush1.bf16.msra.mxu0 0
        %366 = vmatprep.subr.bf16.mxu0 0
        %367 = vmatpush1.bf16.msra.mxu0 0
        %368 = vmatprep.subr.bf16.mxu0 0
        %369 = vmatpush1.bf16.msra.mxu0 0
        %370 = vmatprep.subr.bf16.mxu0 0
        %371 = vmatpush1.bf16.msra.mxu0 0
        %372 = vmatprep.subr.bf16.mxu0 0
        %373 = vmatpush1.bf16.msra.mxu0 0
        %374 = vmatprep.subr.bf16.mxu0 0
        %375 = vmatpush1.bf16.msra.mxu0 0
        %376 = vmatprep.subr.bf16.mxu0 0
        %377 = vmatpush1.bf16.msra.mxu0 0
        %378 = vmatprep.subr.bf16.mxu0 0
        %379 = vmatpush1.bf16.msra.mxu0 0
        %380 = vmatprep.subr.bf16.mxu0 0
        %381 = vmatpush1.bf16.msra.mxu0 0
        %382 = vmatprep.subr.bf16.mxu0 0
        %383 = vmatpush1.bf16.msra.mxu0 0
        %384 = vmatprep.subr.bf16.mxu0 0
        %385 = vmatpush1.bf16.msra.mxu0 0
        %386 = vmatprep.mubr.bf16.mxu0 0
        %387 = vmatmul.mubr.bf16.gmra.mrb[0].mxu0 %v352
        %v388 = vpop.f32.mrb[0].mxu0
        %v389 = vadd.f32 %v336, %v388
        %v390 = vpop.f32.mrb[0].mxu0
        %v391 = vpop.f32.mrb[0].mxu0
        %v392 = vpop.f32.mrb[0].mxu0
        %393 = vdwg.mxu0
        %v394 = vmax.f32 %v389, 0.0
        %v395 = vpack.c.bf16 %v394, %v394
        %v396 = vld [vmem:[#allocation7] sm:$0xf]
        %v397 = vld [vmem:[#allocation7 + $0x4] sm:$0xf]
        %v398 = vld [vmem:[#allocation7 + $0x8] sm:$0xf]
        %v399 = vld [vmem:[#allocation7 + $0xc] sm:$0xf]
        %v400 = vld [vmem:[#allocation7 + $0x10] sm:$0xf]
        %v401 = vld [vmem:[#allocation7 + $0x14] sm:$0xf]
        %v402 = vld [vmem:[#allocation7 + $0x18] sm:$0xf]
        %v403 = vld [vmem:[#allocation7 + $0x1c] sm:$0xf]
        %v404 = vld [vmem:[#allocation7 + $0x20] sm:$0xf]
        %v405 = vld [vmem:[#allocation7 + $0x24] sm:$0xf]
        %v406 = vld [vmem:[#allocation7 + $0x28] sm:$0xf]
        %v407 = vld [vmem:[#allocation7 + $0x2c] sm:$0xf]
        %v408 = vld [vmem:[#allocation7 + $0x30] sm:$0xf]
        %v409 = vld [vmem:[#allocation7 + $0x34] sm:$0xf]
        %v410 = vld [vmem:[#allocation7 + $0x38] sm:$0xf]
        %v411 = vld [vmem:[#allocation7 + $0x3c] sm:$0xf]
        %v412 = vld [vmem:[%s4] sm:$0x1]
        %v414 = vlaneseq
        %v415 = vshrl.u32 %v414, 7
        %v416 = vsub.s32 0, %v415
        %v417 = vrot.slane %v412, %v416
        %v435 = vunpack.c.l.b16 %v396
        %v436 = vunpack.c.l.b16 %v397
        %v437 = vunpack.c.l.b16 %v398
        %v438 = vunpack.c.l.b16 %v399
        %v439 = vunpack.c.l.b16 %v400
        %v440 = vunpack.c.l.b16 %v401
        %v441 = vunpack.c.l.b16 %v402
        %v442 = vunpack.c.l.b16 %v403
        %v443 = vunpack.c.l.b16 %v404
        %v444 = vunpack.c.l.b16 %v405
        %v445 = vunpack.c.l.b16 %v406
        %v446 = vunpack.c.l.b16 %v407
        %v447 = vunpack.c.l.b16 %v408
        %v448 = vunpack.c.l.b16 %v409
        %v449 = vunpack.c.l.b16 %v410
        %v450 = vunpack.c.l.b16 %v411
        %v451 = vpack.c.b16 %v436, %v435
        %v452 = vpack.c.b16 %v438, %v437
        %v453 = vpack.c.b16 %v440, %v439
        %v454 = vpack.c.b16 %v442, %v441
        %v455 = vpack.c.b16 %v444, %v443
        %v456 = vpack.c.b16 %v446, %v445
        %v457 = vpack.c.b16 %v448, %v447
        %v458 = vpack.c.b16 %v450, %v449
        %467 = vmatprep.subr.bf16.mxu0 0
        %468 = vmatpush1.bf16.msra.mxu0 %v451
        %469 = vmatprep.subr.bf16.mxu0 0
        %470 = vmatpush1.bf16.msra.mxu0 %v452
        %471 = vmatprep.subr.bf16.mxu0 0
        %472 = vmatpush1.bf16.msra.mxu0 %v453
        %473 = vmatprep.subr.bf16.mxu0 0
        %474 = vmatpush1.bf16.msra.mxu0 %v454
        %475 = vmatprep.subr.bf16.mxu0 0
        %476 = vmatpush1.bf16.msra.mxu0 %v455
        %477 = vmatprep.subr.bf16.mxu0 0
        %478 = vmatpush1.bf16.msra.mxu0 %v456
        %479 = vmatprep.subr.bf16.mxu0 0
        %480 = vmatpush1.bf16.msra.mxu0 %v457
        %481 = vmatprep.subr.bf16.mxu0 0
        %482 = vmatpush1.bf16.msra.mxu0 %v458
        %483 = vmatprep.subr.bf16.mxu0 0
        %484 = vmatpush1.bf16.msra.mxu0 0
        %485 = vmatprep.subr.bf16.mxu0 0
        %486 = vmatpush1.bf16.msra.mxu0 0
        %487 = vmatprep.subr.bf16.mxu0 0
        %488 = vmatpush1.bf16.msra.mxu0 0
        %489 = vmatprep.subr.bf16.mxu0 0
        %490 = vmatpush1.bf16.msra.mxu0 0
        %491 = vmatprep.subr.bf16.mxu0 0
        %492 = vmatpush1.bf16.msra.mxu0 0
        %493 = vmatprep.subr.bf16.mxu0 0
        %494 = vmatpush1.bf16.msra.mxu0 0
        %495 = vmatprep.subr.bf16.mxu0 0
        %496 = vmatpush1.bf16.msra.mxu0 0
        %497 = vmatprep.subr.bf16.mxu0 0
        %498 = vmatpush1.bf16.msra.mxu0 0
        %499 = vmatprep.mubr.bf16.mxu0 0
        %500 = vmatmul.mubr.bf16.gmra.mrb[0].mxu0 %v395
        %v501 = vpop.f32.mrb[0].mxu0
        %v502 = vadd.f32 %v417, %v501
        %v503 = vpop.f32.mrb[0].mxu0
        %v504 = vpop.f32.mrb[0].mxu0
        %v505 = vpop.f32.mrb[0].mxu0
        %506 = vdwg.mxu0
        %v507 = vmax.f32 %v502, 0.0
        %v508 = vld [vmem:[%s5] sm:$0x1]
        %v510 = vlaneseq
        %v511 = vshrl.u32 %v510, 7
        %v512 = vsub.s32 0, %v511
        %v513 = vrot.slane %v508, %v512
        %v515 = vmul.f32 %v507, %v513
        %516 = vadd.xlane.f32.xlu0 %v515
        %v517 = vpop.xlane.xlu0 %516
        %s518 = sld [smem:[#allocation2]]
        %v519 = vstv %s518
        %v520 = vadd.f32 %v517, %v519
        %v521 = vxor.u32 %v520, 2147483648
        %v522 = vmul.f32 %v521, 1.442695
        %v523 = vpow.pop %v522
        %v524 = vadd.f32 %v523, 1.0
        %v525 = vrcp.pop %v524
        %v526 = vmul.f32 1.0, %v525
        %vm527 = vcmask 7168
        %528 = vst.msk [vmem:[%s323] sm:$0xff] %vm527, %v526
        %p529 = scmp.lt.s32.totalorder %s23, 2
        %s530 = scalar_select %p529, %s23, 2
        %s531 = smul.addr %s530, 8
        %s532 = scalar_lea.vmem %s7, %s531
        // Predicated region
        $region61: #{tpu_custom_call.1} parent=47 // pred_check
          %p533 = pneg %p193
        $region62: #{tpu_custom_call.1} parent=47 // pred_check_branch
          %535 = sbr.rel (%p533) target = $region64
        $region63: #{tpu_custom_call.1} parent=47 // pred_region
          _
        $region64: #{tpu_custom_call.1} parent=47 // pred_fallthru
          _
      $region48: #{tpu_custom_call.1} parent=5 // pred_fallthru
        _
      %p536 = scmp.le.s32.totalorder 2, %s18
      // Predicated region
      $region65: #{tpu_custom_call.1} parent=5 // pred_check
        %p537 = pneg %p536
      $region66: #{tpu_custom_call.1} parent=5 // pred_check_branch
        %539 = sbr.rel (%p537) target = $region68
      $region67: #{tpu_custom_call.1} parent=5 // pred_region
        %s540 = ssub.s32 %s18, 2
        // Predicated region
        $region69: #{tpu_custom_call.1} parent=67 // pred_check
          %p541 = pneg %p199
        $region70: #{tpu_custom_call.1} parent=67 // pred_check_branch
          %543 = sbr.rel (%p541) target = $region72
        $region71: #{tpu_custom_call.1} parent=67 // pred_region
          %p544 = scmp.lt.s32.totalorder %s24, 2
          %s545 = scalar_select %p544, %s24, 2
          %s546 = smul.addr %s545, 8
          %s547 = scalar_lea.vmem %s7, %s546
        $region72: #{tpu_custom_call.1} parent=67 // pred_fallthru
          _
      $region68: #{tpu_custom_call.1} parent=5 // pred_fallthru
        _
    $region6: #{tpu_custom_call.1} parent=1 // loop_footer
      %s22 = sadd.s32 1, %s18
    $region7: #{tpu_custom_call.1} parent=1 // loop_footer_branch
      %17 = sbr.rel target = $region3
    $region8: #{tpu_custom_call.1} parent=1 // loop_exit
      _
    %548 = vsyncpa [#allocation4], 1
    %s549 = scalar_lea.sflag [#allocation4], 1
    %550 = vsyncpa %s549, 1
    %551 = vsyncpa [#allocation6], 1

</llo_original>
